<compile_context>
chip_gen: v7x
topology: tpu7x:2x2x1
jax: 0.10.0
libtpu: 0.0.40
codegen_flags: <defaults>
</compile_context>

<pallas_src>
import jax
import jax.numpy as jnp
from jax.experimental import pallas as pl
from jax.experimental.pallas import tpu as pltpu


def _pick_chunk_rows(dim0: int, row_bytes: int, target_bytes: int) -> int:
    """Rows of the leading axis per DMA chunk (~target_bytes each)."""
    rows = max(1, min(dim0, target_bytes // max(1, row_bytes)))
    # v7x megacore: force >= 2 grid steps (one per TensorCore) once the copy
    # is big enough to be worth splitting across cores.
    if rows >= dim0 and dim0 >= 2 and dim0 * row_bytes >= (4 << 20):
        rows = (dim0 + 1) // 2
    return rows


def _hbm_copy(src: jax.Array, chunk_bytes: int) -> jax.Array:
    """Materializing identity copy via chunked HBM->HBM DMA (no VMEM staging)."""
    dim0 = src.shape[0]
    row_elems = 1
    for d in src.shape[1:]:
        row_elems *= d
    row_bytes = row_elems * jnp.dtype(src.dtype).itemsize

    chunk = _pick_chunk_rows(dim0, row_bytes, chunk_bytes)
    num_chunks = pl.cdiv(dim0, chunk)

    def kernel(x_hbm, o_hbm, sem):
        i = pl.program_id(0)
        # Clamp so every chunk has the same static size; a ragged final chunk
        # simply overlaps the previous one (identical bytes -> harmless).
        start = jnp.minimum(i * chunk, dim0 - chunk)
        cp = pltpu.make_async_copy(
            x_hbm.at[pl.ds(start, chunk)],
            o_hbm.at[pl.ds(start, chunk)],
            sem,
        )
        cp.start()
        cp.wait()

    return pl.pallas_call(
        kernel,
        out_shape=jax.ShapeDtypeStruct(src.shape, src.dtype),
        grid=(num_chunks,),
        in_specs=[pl.BlockSpec(memory_space=pl.ANY)],
        out_specs=pl.BlockSpec(memory_space=pl.ANY),
        scratch_shapes=[pltpu.SemaphoreType.DMA],
        compiler_params=pltpu.CompilerParams(
            dimension_semantics=("parallel",),
        ),
    )(src)


def pallas_flatten(
    x: jax.Array,
    full: bool = False,
    materialize: bool = True,
    chunk_bytes: int = 8 << 20,
) -> jax.Array:
    """Equivalent of Flatten(full).forward(x) for any >=1D input (e.g. NCHW)."""
    n = x.shape[0] if x.ndim >= 1 else 1
    rest = 1
    for d in x.shape[1:]:
        rest *= d
    out_shape = (n * rest,) if full else (n, rest)

    # Row-major re-view to the target shape.  When the layouts agree this is
    # metadata-only; otherwise XLA performs the (unavoidable) relayout here
    # instead of hiding a second copy behind the kernel.
    x_view = x.reshape(out_shape)

    if not materialize or x_view.size == 0:
        # Production-optimal short circuit: a flatten needs no data movement.
        return x_view

    return _hbm_copy(x_view, chunk_bytes)


class Flatten:
    """Pallas equivalent of the PyTorch Flatten module."""

    def __init__(self, full: bool = False):
        self.full = full

    def __call__(self, x: jax.Array) -> jax.Array:
        return pallas_flatten(x, full=self.full)


if __name__ == "__main__":
    key = jax.random.PRNGKey(0)
    # NCHW input consistent with a conv feature map: batch=2, C=4, H=W=16.
    x = jax.random.normal(key, (2, 4, 16, 16), dtype=jnp.float32)

    # full=False path: x.view(x.size(0), -1)
    y = jax.block_until_ready(pallas_flatten(x, full=False))
    assert y.shape == (2, 4 * 16 * 16), y.shape
    assert y.dtype == x.dtype
    assert jnp.array_equal(y, x.reshape(x.shape[0], -1))

    # full=True path: x.view(-1)
    y_full = jax.block_until_ready(pallas_flatten(x, full=True))
    assert y_full.shape == (2 * 4 * 16 * 16,), y_full.shape
    assert jnp.array_equal(y_full, x.reshape(-1))

    # Multi-chunk DMA path with a ragged (clamped/overlapping) final chunk,
    # exercised at a small shape by shrinking the per-chunk byte target.
    x2 = jax.random.normal(jax.random.PRNGKey(1), (10, 4, 16, 16), jnp.float32)
    y2 = jax.block_until_ready(
        pallas_flatten(x2, full=False, chunk_bytes=16 << 10)
    )
    assert y2.shape == (10, 4 * 16 * 16), y2.shape
    assert jnp.array_equal(y2, x2.reshape(10, -1))

    # Module-style wrapper.
    y3 = jax.block_until_ready(Flatten(full=False)(x))
    assert jnp.array_equal(y3, x.reshape(2, -1))

    print("KERNEL_OK")
</pallas_src>

<mosaic_0001>
module attributes {stable_mosaic.version = 11 : i64} {
  func.func @kernel(%arg0: i32, %arg1: memref<2x1024xf32, #tpu.memory_space<any>>, %arg2: memref<2x1024xf32, #tpu.memory_space<any>>, %arg3: memref<!tpu.dma_semaphore, #tpu.memory_space<semaphore_mem>>) attributes {dimension_semantics = [#tpu.dimension_semantics<parallel>], iteration_bounds = array<i64: 1>, scalar_prefetch = 0 : i64, scratch_operands = 1 : i64, tpu.core_type = #tpu.core_type<tc>, window_params = [{}, {}]} {
    %c2_i32 = arith.constant 2 : i32
    %0 = arith.muli %arg0, %c2_i32 : i32
    %c0_i32 = arith.constant 0 : i32
    %1 = arith.minsi %0, %c0_i32 : i32
    %c0_i32_0 = arith.constant 0 : i32
    %2 = tpu.memref_slice %arg1[%1, %c0_i32_0] : memref<2x1024xf32, #tpu.memory_space<any>> -> memref<2x1024xf32, #tpu.memory_space<any>>
    %c0_i32_1 = arith.constant 0 : i32
    %3 = tpu.memref_slice %arg2[%1, %c0_i32_1] : memref<2x1024xf32, #tpu.memory_space<any>> -> memref<2x1024xf32, #tpu.memory_space<any>>
    tpu.enqueue_dma source(%2 : memref<2x1024xf32, #tpu.memory_space<any>>) target(%3 : memref<2x1024xf32, #tpu.memory_space<any>>) target_semaphore(%arg3 : memref<!tpu.dma_semaphore, #tpu.memory_space<semaphore_mem>>)
    %c0_i32_2 = arith.constant 0 : i32
    %4 = tpu.memref_slice %arg1[%1, %c0_i32_2] : memref<2x1024xf32, #tpu.memory_space<any>> -> memref<2x1024xf32, #tpu.memory_space<any>>
    %c0_i32_3 = arith.constant 0 : i32
    %5 = tpu.memref_slice %arg2[%1, %c0_i32_3] : memref<2x1024xf32, #tpu.memory_space<any>> -> memref<2x1024xf32, #tpu.memory_space<any>>
    tpu.wait_dma2 semaphore(%arg3 : memref<!tpu.dma_semaphore, #tpu.memory_space<semaphore_mem>>) src(%4 : memref<2x1024xf32, #tpu.memory_space<any>>) dst(%5 : memref<2x1024xf32, #tpu.memory_space<any>>)
    return
  }
}

</mosaic_0001>

<llo_original>
// kernel: tpu_custom_call.1
$region0: #{tpu_custom_call.1}
  #allocation0 [shape = 'u32[]', space=smem, size = 0x4, offset = 0x4, fixed_abs, tag = 'smem constant byte address 0x4 - core index']
  #allocation1 [shape = 'u32[144,128]{1,0:T(1,128)}', space=vmem, size = 0x12000, scoped, tag = 'internal scratch']
  #allocation2 [shape = 's32[1]{0}', space=sflag, size = 0x4, scoped, tag = 'scratch operand']
  #allocation3 [shape = 's32[]', space=sflag, size = 0x4, offset = 0, fixed_abs, tag = 'sflag constant byte address 0x0 - dummy sync flag']
  #allocation4 [shape = 'u32[0]{0}', space=smem, size = 0, offset = 0, fixed_abs, tag = 'smem constant byte address 0x0 - null']
  %s0 = inlined_call_operand.hbm [shape: f32[2,1024], index: 0, kind: input, shape index: {}]
  %s1 = inlined_call_operand.hbm [shape: f32[2,1024], index: 1, kind: output, shape index: {}]
  %s2 = sld [smem:[#allocation0]]
  $region2: #{tpu_custom_call.1} parent=0
    _
  %s4 = ssub.s32 1, %s2
  %s5 = scalar_select 0, %s4, %s2
  %s6 = smul.u32 0, 2
  %p7 = scmp.lt.s32.totalorder %s6, 0
  %s8 = scalar_select %p7, %s6, 0
  %s9 = sshra.s32 %s8, 1
  %s10 = sand.u32 %s8, 1
  %s11 = smul.u32 %s9, 8
  %s12 = smul.addr %s11, 32
  %s13 = scalar_lea.hbm %s0, %s12
  %s14 = smul.addr %s11, 32
  %s15 = scalar_lea.hbm %s1, %s14
  %s17 = sshll.u32 1, 14
  %s18 = sxor.u32 4294967295, %s17
  %s21 = sshll.u32 3, 24
  %s22 = sxor.u32 4294967295, %s21
  %s23 = sand.u32 0, %s22
  %s25 = sor.u32 %s23, 0
  %28 = dma.general %s13, 256, %s15, [#allocation2], [#allocation3], [#allocation4], %s25, 0
  %s29 = smul.u32 2, 1
  %s30 = smul.u32 %s29, 8
  %s31 = sshll.u32 %s30, 4
  %32 = dma.done [#allocation2], %s31
  %33 = vsyncmov [#allocation2]
  %s34 = vpop.sfrf %33
  %p35 = scmp.eq.s32.totalorder %s34, 0
  %p36 = pneg %p35
  %38 = shalt.err (%p36)

</llo_original>
